<compile_context>
chip_gen: v7x
topology: tpu7x:2x2x1
jax: 0.10.0
libtpu: 0.0.40
codegen_flags: <defaults>
</compile_context>

<pallas_src>
import functools

import numpy as np
import jax
import jax.numpy as jnp
from jax import lax
from jax.experimental import pallas as pl
from jax.experimental.pallas import tpu as pltpu


def _round_up(x, m):
    return (x + m - 1) // m * m


def _dep_head_kernel(t_ref, w_ref, b_ref, final_ref, logits_ref, *, num_labels):
    """One grid step processes a (Bt, N, H) tile of token representations.

    t_ref:      (Bt, N, H)   compute dtype (bf16)
    w_ref:      (H, H + E)   fused weight [Wb @ Wl^T | W_cls^T | root | 0-pad]
    b_ref:      (1, E)       classifier bias padded with zeros (f32)
    final_ref:  (Bt, N, N)   arc scores (f32)
    logits_ref: (Bt, N, E)   lane-dense logits slab (f32); columns [:L] = logits
    """
    bt, n, h = t_ref.shape
    t = t_ref[...]                                   # (Bt, N, H) bf16
    # N is padded to a multiple of 8, so merging the leading dims is
    # layout-compatible (no (8,128) tile-boundary crossing).
    t2d = t.reshape(bt * n, h)

    # Single fused MXU matmul: arc projection + classifier logits + root score.
    p = jnp.dot(t2d, w_ref[...], preferred_element_type=jnp.float32)  # (Bt*N, H+E)

    proj = p[:, :h].astype(t.dtype).reshape(bt, n, h)   # (Bt, N, H)  = T @ (Wb Wl^T)
    ex = p[:, h:].reshape(bt, n, -1)                    # (Bt, N, E)  f32

    # final[b,n,m] = proj[b,n,:] . t[b,m,:]  ==  (T @ Wb @ Wl^T @ T^T)[b,n,m]
    final = lax.dot_general(
        proj, t, dimension_numbers=(((2,), (2,)), ((0,), (0,))),
        preferred_element_type=jnp.float32)             # (Bt, N, N)

    # final[:, i, i] += root_score[:, i]; the root score is column L of `ex`
    # (bias is zero there, so reading it pre/post bias is equivalent).
    root_score = ex[:, :, num_labels:num_labels + 1]    # (Bt, N, 1)
    eye = (lax.broadcasted_iota(jnp.int32, (n, n), 0) ==
           lax.broadcasted_iota(jnp.int32, (n, n), 1)).astype(jnp.float32)
    final = final + eye[None] * root_score

    final_ref[...] = final
    logits_ref[...] = ex + b_ref[...][None]             # bias zero at/after col L


def dep_multitask_head(token_reprs, w_lin, w_bil, root, w_cls, b_cls, *,
                       block_rows=512, compute_dtype=jnp.bfloat16):
    """token_reprs: (B, N, H) f32 (output of the pad_sequence glue);
       w_lin, w_bil: (H, H); root: (H,); w_cls: (L, H); b_cls: (L,).
       Returns (final (B, N, N) f32, logits (B, N, L) f32)."""
    B, N_orig, H = token_reprs.shape
    L = w_cls.shape[0]

    # ---- Fold weights once (plain JAX, outside the kernel) ------------------
    M = jnp.dot(w_bil, w_lin.T)                                     # (H, H) f32
    E = _round_up(L + 1, 128)                                       # lane-dense extras
    extras = jnp.zeros((H, E), jnp.float32)
    extras = extras.at[:, :L].set(w_cls.T)                          # classifier
    extras = extras.at[:, L].set(root)                              # root vector
    w_cat = jnp.concatenate([M, extras], axis=1).astype(compute_dtype)  # (H, H+E)
    b_pad = jnp.zeros((1, E), jnp.float32).at[0, :L].set(b_cls)

    # ---- Pad N to a sublane multiple; batch several sentences per step ------
    N = _round_up(N_orig, 8)
    if N != N_orig:
        token_reprs = jnp.pad(token_reprs, ((0, 0), (0, N - N_orig), (0, 0)))
    Bt = max(1, min(B, block_rows // N))
    if B >= 2:                      # keep >= 2 grid steps so both v7x TCs get work
        Bt = min(Bt, max(1, B // 2))
    Bp = _round_up(B, Bt)
    if Bp != B:
        token_reprs = jnp.pad(token_reprs, ((0, Bp - B), (0, 0), (0, 0)))
    t = token_reprs.astype(compute_dtype)

    grid = (Bp // Bt,)

    # ---- VMEM budget (re-derived so tiles fitting v5e/v6e also fit v7x) -----
    itm = jnp.dtype(compute_dtype).itemsize
    est = (2 * Bt * N * H * itm            # token-repr double buffer
           + 2 * H * (H + E) * itm         # fused weight (double-buffered)
           + 2 * E * 4                     # bias
           + 2 * Bt * N * N * 4            # final output double buffer
           + 2 * Bt * N * E * 4            # logits output double buffer
           + Bt * N * (H + E) * 4          # matmul result
           + Bt * N * N * 4 + Bt * N * H * 4)   # intermediates
    vmem_limit = int(min(max(4 * est, 16 * 2 ** 20), 48 * 2 ** 20))

    grid_spec = pltpu.PrefetchScalarGridSpec(
        num_scalar_prefetch=0,
        grid=grid,
        in_specs=[
            pl.BlockSpec((Bt, N, H), lambda b: (b, 0, 0)),       # token reprs
            pl.BlockSpec((H, H + E), lambda b: (0, 0)),          # fused weight
            pl.BlockSpec((1, E), lambda b: (0, 0)),              # padded bias
        ],
        out_specs=[
            pl.BlockSpec((Bt, N, N), lambda b: (b, 0, 0)),       # arc scores
            pl.BlockSpec((Bt, N, E), lambda b: (b, 0, 0)),       # lane-dense logits
        ],
    )
    final_pad, logits_pad = pl.pallas_call(
        functools.partial(_dep_head_kernel, num_labels=L),
        out_shape=(
            jax.ShapeDtypeStruct((Bp, N, N), jnp.float32),
            jax.ShapeDtypeStruct((Bp, N, E), jnp.float32),
        ),
        grid_spec=grid_spec,
        compiler_params=pltpu.CompilerParams(
            dimension_semantics=("parallel",),
            vmem_limit_bytes=vmem_limit),
    )(t, w_cat, b_pad)

    return final_pad[:B, :N_orig, :N_orig], logits_pad[:B, :N_orig, :L]


def reference_head(token_reprs, w_lin, w_bil, root, w_cls, b_cls):
    """Pure-JAX f32 reference mirroring the PyTorch module (labels=None path)."""
    final2 = jnp.einsum('bnh,hg->bng', token_reprs, w_lin)
    final = jnp.einsum('bnh,hg,bmg->bnm', token_reprs, w_bil, final2)
    root_score = jnp.einsum('bnh,h->bn', token_reprs, root)
    N = final.shape[1]
    final = final + root_score[:, :, None] * jnp.eye(N, dtype=final.dtype)[None]
    logits = jnp.einsum('bnh,lh->bnl', token_reprs, w_cls) + b_cls[None, None, :]
    return final, logits


if __name__ == "__main__":
    # Small synthetic shapes consistent with the module's forward.
    B, S, H, num_labels = 2, 16, 32, 5

    key = jax.random.PRNGKey(0)
    k_seq, k_lin, k_bil, k_root, k_cw, k_cb = jax.random.split(key, 6)

    # Stand-in for dropout(base_model(input_ids)[0]) in eval mode.
    sequence_output = jax.random.normal(k_seq, (B, S, H), dtype=jnp.float32)

    # label_masks: which subword positions correspond to real tokens.
    label_masks = np.zeros((B, S), dtype=bool)
    label_masks[0, :8] = True
    label_masks[1, [0, 2, 3, 5, 7, 9]] = True

    # Glue: token_reprs = pad_sequence([emb[mask] for ...], padding_value=-1)
    seq_np = np.asarray(sequence_output)
    gathered = [seq_np[b][label_masks[b]] for b in range(B)]
    N = max(g.shape[0] for g in gathered)
    token_reprs_np = np.full((B, N, H), -1.0, dtype=np.float32)
    for b, g in enumerate(gathered):
        token_reprs_np[b, :g.shape[0]] = g
    token_reprs = jnp.asarray(token_reprs_np)

    # Deterministic parameter init (shapes from __init__; linear/bilinear biases
    # are unused in forward, matching the PyTorch einsum usage).
    w_lin = jax.random.normal(k_lin, (H, H), dtype=jnp.float32) * 0.05
    w_bil = jax.random.normal(k_bil, (H, H), dtype=jnp.float32) * 0.05
    root = jax.random.uniform(k_root, (H,), dtype=jnp.float32)      # torch.rand(H)
    w_cls = jax.random.normal(k_cw, (num_labels, H), dtype=jnp.float32) * 0.05
    b_cls = jax.random.normal(k_cb, (num_labels,), dtype=jnp.float32) * 0.05

    final, logits = dep_multitask_head(token_reprs, w_lin, w_bil, root,
                                       w_cls, b_cls)
    final = jax.block_until_ready(final)
    logits = jax.block_until_ready(logits)

    ref_final, ref_logits = reference_head(token_reprs, w_lin, w_bil, root,
                                           w_cls, b_cls)
    # bf16 MXU inputs + the Wb@Wl^T re-association shift rounding -> looser tol.
    np.testing.assert_allclose(np.asarray(final), np.asarray(ref_final),
                               rtol=5e-2, atol=5e-2)
    np.testing.assert_allclose(np.asarray(logits), np.asarray(ref_logits),
                               rtol=5e-2, atol=5e-2)

    print("KERNEL_OK")
</pallas_src>

<mosaic_0001>
module attributes {stable_mosaic.version = 11 : i64} {
  func.func @_dep_head_kernel(%arg0: i32, %arg1: memref<1x8x32xbf16, #tpu.memory_space<vmem>>, %arg2: memref<32x160xbf16, #tpu.memory_space<vmem>>, %arg3: memref<1x128xf32, #tpu.memory_space<vmem>>, %arg4: memref<1x8x8xf32, #tpu.memory_space<vmem>>, %arg5: memref<1x8x128xf32, #tpu.memory_space<vmem>>) attributes {dimension_semantics = [#tpu.dimension_semantics<parallel>], iteration_bounds = array<i64: 2>, scalar_prefetch = 0 : i64, scratch_operands = 0 : i64, tpu.core_type = #tpu.core_type<tc>, window_params = [{transform_indices = @transform_0, window_bounds = array<i64: 1, 8, 32>}, {pipeline_mode = #tpu.pipeline_mode<synchronous>, transform_indices = @transform_1, window_bounds = array<i64: 32, 160>}, {pipeline_mode = #tpu.pipeline_mode<synchronous>, transform_indices = @transform_2, window_bounds = array<i64: 1, 128>}, {transform_indices = @transform_3, window_bounds = array<i64: 1, 8, 8>}, {transform_indices = @transform_4, window_bounds = array<i64: 1, 8, 128>}]} {
    %c0 = arith.constant 0 : index
    %c0_0 = arith.constant 0 : index
    %c0_1 = arith.constant 0 : index
    %0 = vector.load %arg1[%c0, %c0_0, %c0_1] : memref<1x8x32xbf16, #tpu.memory_space<vmem>>, vector<1x8x32xbf16>
    %1 = vector.shape_cast %0 : vector<1x8x32xbf16> to vector<8x32xbf16>
    %c0_2 = arith.constant 0 : index
    %c0_3 = arith.constant 0 : index
    %2 = vector.load %arg2[%c0_2, %c0_3] : memref<32x160xbf16, #tpu.memory_space<vmem>>, vector<32x160xbf16>
    %cst = arith.constant dense<0.000000e+00> : vector<8x160xf32>
    %3 = tpu.matmul %1, %2, %cst {dimension_numbers = #tpu.dot_dimension_numbers<[1], [0], [0], [1], [0, 0, 1, 1], [], []>} : vector<8x32xbf16>, vector<32x160xbf16>, vector<8x160xf32> -> vector<8x160xf32>
    %4 = vector.extract_strided_slice %3 {offsets = [0, 0], sizes = [8, 32], strides = [1, 1]} : vector<8x160xf32> to vector<8x32xf32>
    %5 = arith.truncf %4 : vector<8x32xf32> to vector<8x32xbf16>
    %6 = vector.shape_cast %5 : vector<8x32xbf16> to vector<1x8x32xbf16>
    %7 = vector.extract_strided_slice %3 {offsets = [0, 32], sizes = [8, 128], strides = [1, 1]} : vector<8x160xf32> to vector<8x128xf32>
    %8 = vector.shape_cast %7 : vector<8x128xf32> to vector<1x8x128xf32>
    %cst_4 = arith.constant dense<0.000000e+00> : vector<1x8x8xf32>
    %9 = tpu.matmul %6, %0, %cst_4 {dimension_numbers = #tpu.dot_dimension_numbers<[2], [2], [1], [1], [0, 0, 0, 1, 1, 1], [0], [0]>} : vector<1x8x32xbf16>, vector<1x8x32xbf16>, vector<1x8x8xf32> -> vector<1x8x8xf32>
    %10 = vector.extract_strided_slice %8 {offsets = [0, 0, 5], sizes = [1, 8, 1], strides = [1, 1, 1]} : vector<1x8x128xf32> to vector<1x8x1xf32>
    %11 = tpu.iota {dimensions = array<i32: 0>} : vector<8x8xi32>
    %12 = tpu.iota {dimensions = array<i32: 1>} : vector<8x8xi32>
    %13 = arith.cmpi eq, %11, %12 : vector<8x8xi32>
    %14 = arith.extui %13 : vector<8x8xi1> to vector<8x8xi32>
    %15 = arith.sitofp %14 : vector<8x8xi32> to vector<8x8xf32>
    %16 = vector.shape_cast %15 : vector<8x8xf32> to vector<1x8x8xf32>
    %17 = vector.broadcast %10 : vector<1x8x1xf32> to vector<1x8x8xf32>
    %18 = arith.mulf %16, %17 : vector<1x8x8xf32>
    %19 = arith.addf %9, %18 : vector<1x8x8xf32>
    %c0_5 = arith.constant 0 : index
    %c0_6 = arith.constant 0 : index
    %c0_7 = arith.constant 0 : index
    %20 = vector.load %arg4[%c0_5, %c0_6, %c0_7] : memref<1x8x8xf32, #tpu.memory_space<vmem>>, vector<1x8x8xf32>
    tpu.vector_store %arg4[%c0_5, %c0_6, %c0_7], %19 {strides = array<i32>} : memref<1x8x8xf32, #tpu.memory_space<vmem>>, vector<1x8x8xf32>,
    %c0_8 = arith.constant 0 : index
    %c0_9 = arith.constant 0 : index
    %21 = vector.load %arg3[%c0_8, %c0_9] : memref<1x128xf32, #tpu.memory_space<vmem>>, vector<1x128xf32>
    %22 = vector.shape_cast %21 : vector<1x128xf32> to vector<1x1x128xf32>
    %23 = vector.broadcast %22 : vector<1x1x128xf32> to vector<1x8x128xf32>
    %24 = arith.addf %8, %23 : vector<1x8x128xf32>
    %c0_10 = arith.constant 0 : index
    %c0_11 = arith.constant 0 : index
    %c0_12 = arith.constant 0 : index
    %25 = vector.load %arg5[%c0_10, %c0_11, %c0_12] : memref<1x8x128xf32, #tpu.memory_space<vmem>>, vector<1x8x128xf32>
    tpu.vector_store %arg5[%c0_10, %c0_11, %c0_12], %24 {strides = array<i32>} : memref<1x8x128xf32, #tpu.memory_space<vmem>>, vector<1x8x128xf32>,
    return
  }
  func.func @transform_0(%arg0: i32) -> (i32, i32, i32) {
    %c0_i32 = arith.constant 0 : i32
    %c0_i32_0 = arith.constant 0 : i32
    %c0_i32_1 = arith.constant 0 : i32
    return %arg0, %c0_i32, %c0_i32_0 : i32, i32, i32
  }
  func.func @transform_1(%arg0: i32) -> (i32, i32) {
    %c0_i32 = arith.constant 0 : i32
    %c0_i32_0 = arith.constant 0 : i32
    %c0_i32_1 = arith.constant 0 : i32
    return %c0_i32, %c0_i32_0 : i32, i32
  }
  func.func @transform_2(%arg0: i32) -> (i32, i32) {
    %c0_i32 = arith.constant 0 : i32
    %c0_i32_0 = arith.constant 0 : i32
    %c0_i32_1 = arith.constant 0 : i32
    return %c0_i32, %c0_i32_0 : i32, i32
  }
  func.func @transform_3(%arg0: i32) -> (i32, i32, i32) {
    %c0_i32 = arith.constant 0 : i32
    %c0_i32_0 = arith.constant 0 : i32
    %c0_i32_1 = arith.constant 0 : i32
    return %arg0, %c0_i32, %c0_i32_0 : i32, i32, i32
  }
  func.func @transform_4(%arg0: i32) -> (i32, i32, i32) {
    %c0_i32 = arith.constant 0 : i32
    %c0_i32_0 = arith.constant 0 : i32
    %c0_i32_1 = arith.constant 0 : i32
    return %arg0, %c0_i32, %c0_i32_0 : i32, i32, i32
  }
}

</mosaic_0001>

<llo_original>
// kernel: tpu_custom_call.1
$region0: #{tpu_custom_call.1}
  #allocation0 [shape = 'u32[]', space=smem, size = 0x4, offset = 0x4, fixed_abs, tag = 'smem constant byte address 0x4 - core index']
  #allocation1 [shape = 'u32[144,128]{1,0:T(1,128)}', space=vmem, size = 0x12000, scoped, tag = 'internal scratch']
  %s0 = inlined_call_operand.hbm [shape: bf16[2,8,32], index: 0, kind: input, shape index: {}]
  %s1 = inlined_call_operand.hbm [shape: bf16[32,160], index: 1, kind: input, shape index: {}]
  %s2 = inlined_call_operand.vmem [shape: f32[1,128], index: 2, kind: input, shape index: {}]
  %s3 = inlined_call_operand.hbm [shape: f32[2,8,8], index: 3, kind: output, shape index: {0}]
  %s4 = inlined_call_operand.hbm [shape: f32[2,8,128], index: 4, kind: output, shape index: {1}]
  %5 = xla_tuple %s3, %s4
  %s6 = sld [smem:[#allocation0]]
  $region61: #{tpu_custom_call.1} parent=0
    _
  %s8 = ssub.s32 1, %s6
  %s9 = scalar_select 0, %s8, %s6
  $region1: #{tpu_custom_call.1} parent=0
    #allocation2 [shape = 'u8[4096]{0}', space=vmem, size = 0x1000, scoped, tag = 'input window, operand 0']
    #allocation3 [shape = 's32[2]{0}', space=sflag, size = 0x8, scoped, tag = 'scoped memory for tpu_custom_call.1']
    #allocation4 [shape = 's32[2]{0}', space=sflag, size = 0x8, scoped, tag = 'scoped memory for tpu_custom_call.1']
    #allocation5 [shape = 'u8[16384]{0}', space=vmem, size = 0x4000, scoped, tag = 'input window, operand 1, single buffered']
    #allocation6 [shape = 's32[1]{0}', space=sflag, size = 0x4, scoped, tag = 'scoped memory for tpu_custom_call.1']
    #allocation7 [shape = 'u8[8192]{0}', space=vmem, size = 0x2000, scoped, tag = 'output window, operand 0']
    #allocation8 [shape = 'u8[8192]{0}', space=vmem, size = 0x2000, scoped, tag = 'output window, operand 1']
    #allocation9 [shape = 's32[2]{0}', space=sflag, size = 0x8, scoped, tag = 'scoped memory for tpu_custom_call.1']
    %10 = vsyncpa [#allocation3], 0
    %s11 = scalar_lea.sflag [#allocation3], 1
    %12 = vsyncpa %s11, 0
    %13 = vsyncpa [#allocation6], 0
    %14 = vsyncpa [#allocation4], 0
    %s15 = scalar_lea.sflag [#allocation4], 1
    %16 = vsyncpa %s15, 0
    %17 = vsyncpa [#allocation9], 0
    %s18 = scalar_lea.sflag [#allocation9], 1
    %19 = vsyncpa %s18, 0
    loop: start=0, step=1, limit=4
    $region2: #{tpu_custom_call.1} parent=1 // loop_pre_header
      _
    $region3: #{tpu_custom_call.1} parent=1 // loop_header
      %s21 = sphi 0, %s25
      %p22 = scmp.ge.s32.totalorder %s21, 4
      %s31 = sphi 0, %s33
      %s34 = sphi 0, %s31
      %s35 = sphi 0, %s34
      %s51 = sphi 0, %s35
      %s55 = sphi 0, %s55
      %s57 = sphi 0, %s55
      %s58 = sphi 0, %s57
      %s72 = sphi 0, %s58
      %s76 = sphi 0, %s76
      %s78 = sphi 0, %s76
      %s79 = sphi 0, %s78
      %s93 = sphi 0, %s79
      %s99 = sphi 0, %s101
      %s102 = sphi 0, %s99
      %s103 = sphi 0, %s102
      %s119 = sphi 0, %s103
      %s125 = sphi 0, %s127
      %s128 = sphi 0, %s125
      %s129 = sphi 0, %s128
      %s145 = sphi 0, %s129
    $region4: #{tpu_custom_call.1} parent=1 // loop_header_branch
      %24 = sbr.rel (%p22) target = $region8
    $region5: #{tpu_custom_call.1} parent=1 // loop_body
      %s26 = ssub.s32 %s21, 1
      %s27 = ssub.s32 %s21, 2
      %s28 = sadd.s32 %s21, 1
      %s29 = ssub.s32 %s21, %s28
      %p30 = scmp.eq.s32.totalorder %s29, 0
      %s32 = sadd.s32 %s31, 1
      %s33 = scalar_select %p30, %s31, %s32
      %p36 = pneg %p30
      %p37 = scmp.eq.s32.totalorder %s21, 1
      %p38 = por %p36, %p37
      %p39 = scmp.ne.s32.totalorder %s31, %s34
      %p40 = scmp.eq.s32.totalorder %s21, 0
      %p41 = por %p39, %p40
      %p42 = scmp.ne.s32.totalorder %s31, %s34
      %p43 = scmp.eq.s32.totalorder %s26, 1
      %p44 = por %p42, %p43
      %p45 = scmp.ne.s32.totalorder %s34, %s35
      %p46 = scmp.eq.s32.totalorder %s26, 0
      %p47 = por %p45, %p46
      %p48 = scmp.ne.s32.totalorder %s34, %s35
      %p49 = scmp.eq.s32.totalorder %s27, 1
      %p50 = por %p48, %p49
      %p52 = scmp.ne.s32.totalorder %s35, %s51
      %p53 = scmp.eq.s32.totalorder %s27, 0
      %p54 = por %p52, %p53
      %s56 = sadd.s32 %s55, 1
      %p59 = scmp.eq.s32.totalorder %s21, 1
      %p60 = scmp.ne.s32.totalorder %s55, %s57
      %p61 = scmp.eq.s32.totalorder %s21, 0
      %p62 = por %p60, %p61
      %p63 = scmp.ne.s32.totalorder %s55, %s57
      %p64 = scmp.eq.s32.totalorder %s26, 1
      %p65 = por %p63, %p64
      %p66 = scmp.ne.s32.totalorder %s57, %s58
      %p67 = scmp.eq.s32.totalorder %s26, 0
      %p68 = por %p66, %p67
      %p69 = scmp.ne.s32.totalorder %s57, %s58
      %p70 = scmp.eq.s32.totalorder %s27, 1
      %p71 = por %p69, %p70
      %p73 = scmp.ne.s32.totalorder %s58, %s72
      %p74 = scmp.eq.s32.totalorder %s27, 0
      %p75 = por %p73, %p74
      %s77 = sadd.s32 %s76, 1
      %p80 = scmp.eq.s32.totalorder %s21, 1
      %p81 = scmp.ne.s32.totalorder %s76, %s78
      %p82 = scmp.eq.s32.totalorder %s21, 0
      %p83 = por %p81, %p82
      %p84 = scmp.ne.s32.totalorder %s76, %s78
      %p85 = scmp.eq.s32.totalorder %s26, 1
      %p86 = por %p84, %p85
      %p87 = scmp.ne.s32.totalorder %s78, %s79
      %p88 = scmp.eq.s32.totalorder %s26, 0
      %p89 = por %p87, %p88
      %p90 = scmp.ne.s32.totalorder %s78, %s79
      %p91 = scmp.eq.s32.totalorder %s27, 1
      %p92 = por %p90, %p91
      %p94 = scmp.ne.s32.totalorder %s79, %s93
      %p95 = scmp.eq.s32.totalorder %s27, 0
      %p96 = por %p94, %p95
      %s97 = ssub.s32 %s21, %s28
      %p98 = scmp.eq.s32.totalorder %s97, 0
      %s100 = sadd.s32 %s99, 1
      %s101 = scalar_select %p98, %s99, %s100
      %p104 = pneg %p98
      %p105 = scmp.eq.s32.totalorder %s21, 1
      %p106 = por %p104, %p105
      %p107 = scmp.ne.s32.totalorder %s99, %s102
      %p108 = scmp.eq.s32.totalorder %s21, 0
      %p109 = por %p107, %p108
      %p110 = scmp.ne.s32.totalorder %s99, %s102
      %p111 = scmp.eq.s32.totalorder %s26, 1
      %p112 = por %p110, %p111
      %p113 = scmp.ne.s32.totalorder %s102, %s103
      %p114 = scmp.eq.s32.totalorder %s26, 0
      %p115 = por %p113, %p114
      %p116 = scmp.ne.s32.totalorder %s102, %s103
      %p117 = scmp.eq.s32.totalorder %s27, 1
      %p118 = por %p116, %p117
      %p120 = scmp.ne.s32.totalorder %s103, %s119
      %p121 = scmp.eq.s32.totalorder %s27, 0
      %p122 = por %p120, %p121
      %s123 = ssub.s32 %s21, %s28
      %p124 = scmp.eq.s32.totalorder %s123, 0
      %s126 = sadd.s32 %s125, 1
      %s127 = scalar_select %p124, %s125, %s126
      %p130 = pneg %p124
      %p131 = scmp.eq.s32.totalorder %s21, 1
      %p132 = por %p130, %p131
      %p133 = scmp.ne.s32.totalorder %s125, %s128
      %p134 = scmp.eq.s32.totalorder %s21, 0
      %p135 = por %p133, %p134
      %p136 = scmp.ne.s32.totalorder %s125, %s128
      %p137 = scmp.eq.s32.totalorder %s26, 1
      %p138 = por %p136, %p137
      %p139 = scmp.ne.s32.totalorder %s128, %s129
      %p140 = scmp.eq.s32.totalorder %s26, 0
      %p141 = por %p139, %p140
      %p142 = scmp.ne.s32.totalorder %s128, %s129
      %p143 = scmp.eq.s32.totalorder %s27, 1
      %p144 = por %p142, %p143
      %p146 = scmp.ne.s32.totalorder %s129, %s145
      %p147 = scmp.eq.s32.totalorder %s27, 0
      %p148 = por %p146, %p147
      %p149 = scmp.le.s32.totalorder 1, %s21
      %p150 = scmp.lt.s32.totalorder %s21, 3
      %p151 = pnand %p149, %p150
      %p152 = pneg %p151
      // Predicated region
      $region9: #{tpu_custom_call.1} parent=5 // pred_check
        _
      $region10: #{tpu_custom_call.1} parent=5 // pred_check_branch
        %154 = sbr.rel (%p151) target = $region12
      $region11: #{tpu_custom_call.1} parent=5 // pred_region
        %s155 = ssub.s32 %s21, 1
        // Predicated region
        $region13: #{tpu_custom_call.1} parent=11 // pred_check
          %p156 = pneg %p68
        $region14: #{tpu_custom_call.1} parent=11 // pred_check_branch
          %158 = sbr.rel (%p156) target = $region16
        $region15: #{tpu_custom_call.1} parent=11 // pred_region
          %s160 = ssub.s32 512, 512
          %161 = vsyncadd [#allocation6], %s160
          %s162 = sshll.u32 [#allocation5], 4
          %s163 = int_to_ptr.vmem [resolvable:$true] %s162
          %168 = dma.hbm_to_vmem [thread:$0]  %s1, 512, %s163, [#allocation6], 128, 128, 8
        $region16: #{tpu_custom_call.1} parent=11 // pred_fallthru
          _
        // Predicated region
        $region17: #{tpu_custom_call.1} parent=11 // pred_check
          %p169 = pneg %p89
        $region18: #{tpu_custom_call.1} parent=11 // pred_check_branch
          %171 = sbr.rel (%p169) target = $region20
        $region19: #{tpu_custom_call.1} parent=11 // pred_region
          _
        $region20: #{tpu_custom_call.1} parent=11 // pred_fallthru
          _
      $region12: #{tpu_custom_call.1} parent=5 // pred_fallthru
        _
      %p172 = scmp.lt.s32.totalorder %s21, 2
      // Predicated region
      $region21: #{tpu_custom_call.1} parent=5 // pred_check
        %p173 = pneg %p172
      $region22: #{tpu_custom_call.1} parent=5 // pred_check_branch
        %175 = sbr.rel (%p173) target = $region24
      $region23: #{tpu_custom_call.1} parent=5 // pred_region
        // Predicated region
        $region25: #{tpu_custom_call.1} parent=23 // pred_check
          %p176 = pneg %p41
        $region26: #{tpu_custom_call.1} parent=23 // pred_check_branch
          %178 = sbr.rel (%p176) target = $region28
        $region27: #{tpu_custom_call.1} parent=23 // pred_region
          %s179 = sand.u32 %s31, 1
          %s180 = scalar_lea.sflag [#allocation3], %s179
          %s181 = sand.u32 %s31, 1
          %s182 = smul.addr %s181, 4
          %s183 = scalar_lea.vmem [#allocation2], %s182
          %s185 = ssub.s32 64, 64
          %186 = vsyncadd %s180, %s185
          %s187 = smul.addr %s21, 64
          %s188 = scalar_lea.hbm %s0, %s187
          %s190 = sshll.u32 %s183, 4
          %s191 = int_to_ptr.vmem [resolvable:$true] %s190
          %193 = dma.hbm_to_vmem [thread:$0]  %s188, 64, %s191, %s180
        $region28: #{tpu_custom_call.1} parent=23 // pred_fallthru
          _
      $region24: #{tpu_custom_call.1} parent=5 // pred_fallthru
        _
      %p194 = scmp.le.s32.totalorder 1, %s21
      %p195 = scmp.lt.s32.totalorder %s21, 3
      %p196 = pnand %p194, %p195
      %p197 = pneg %p196
      // Predicated region
      $region29: #{tpu_custom_call.1} parent=5 // pred_check
        _
      $region30: #{tpu_custom_call.1} parent=5 // pred_check_branch
        %199 = sbr.rel (%p196) target = $region32
      $region31: #{tpu_custom_call.1} parent=5 // pred_region
        %s200 = ssub.s32 %s21, 1
        %s201 = sand.u32 %s34, 1
        %s202 = scalar_lea.sflag [#allocation3], %s201
        %s203 = sand.u32 %s34, 1
        %s204 = smul.addr %s203, 4
        %s205 = scalar_lea.vmem [#allocation2], %s204
        // Predicated region
        $region33: #{tpu_custom_call.1} parent=31 // pred_check
          %p206 = pneg %p47
        $region34: #{tpu_custom_call.1} parent=31 // pred_check_branch
          %208 = sbr.rel (%p206) target = $region36
        $region35: #{tpu_custom_call.1} parent=31 // pred_region
          %209 = dma.done %s202, 64
        $region36: #{tpu_custom_call.1} parent=31 // pred_fallthru
          _
        // Predicated region
        $region37: #{tpu_custom_call.1} parent=31 // pred_check
          %p210 = pneg %p68
        $region38: #{tpu_custom_call.1} parent=31 // pred_check_branch
          %212 = sbr.rel (%p210) target = $region40
        $region39: #{tpu_custom_call.1} parent=31 // pred_region
          %213 = dma.done [#allocation6], 512
        $region40: #{tpu_custom_call.1} parent=31 // pred_fallthru
          _
        %s214 = sand.u32 %s34, 1
        %s215 = scalar_lea.sflag [#allocation3], %s214
        %s216 = sand.u32 %s34, 1
        %s217 = smul.addr %s216, 4
        %s218 = scalar_lea.vmem [#allocation2], %s217
        %p219 = pneg %p47
        %p220 = pneg %p44
        %p221 = pneg %p68
        %p222 = pneg %p65
        %p223 = pneg %p89
        %p224 = pneg %p86
        %p225 = pneg %p115
        %p226 = pneg %p112
        %s227 = sand.u32 %s102, 1
        %s228 = scalar_lea.sflag [#allocation4], %s227
        %s229 = sand.u32 %s102, 1
        %s230 = smul.addr %s229, 8
        %s231 = scalar_lea.vmem [#allocation7], %s230
        %p232 = pneg %p141
        %p233 = pneg %p138
        %s234 = sand.u32 %s128, 1
        %s235 = scalar_lea.sflag [#allocation9], %s234
        %s236 = sand.u32 %s128, 1
        %s237 = smul.addr %s236, 8
        %s238 = scalar_lea.vmem [#allocation8], %s237
        %v240 = vld [vmem:[%s205] sm:$0xf]
        %v241 = vld [vmem:[#allocation5] sm:$0xff]
        %v242 = vld [vmem:[#allocation5 + $0x8] sm:$0xff]
        %v243 = vld [vmem:[#allocation5 + $0x10] sm:$0xff]
        %v244 = vld [vmem:[#allocation5 + $0x18] sm:$0xff]
        %v249 = vunpack.c.l.b16 %v241
        %v250 = vunpack.c.h.b16 %v241
        %v251 = vunpack.c.l.b16 %v242
        %v252 = vunpack.c.h.b16 %v242
        %v253 = vunpack.c.l.b16 %v243
        %v254 = vunpack.c.h.b16 %v243
        %v255 = vunpack.c.l.b16 %v244
        %v256 = vunpack.c.h.b16 %v244
        %v257 = vpack.c.b16 %v251, %v249
        %v258 = vpack.c.b16 %v252, %v250
        %v259 = vpack.c.b16 %v255, %v253
        %v260 = vpack.c.b16 %v256, %v254
        %vm265 = vcmask 261120
        %v267 = vsel %vm265, %v240, 0
        %269 = vmatprep.subr.bf16.mxu0 %v258
        %270 = vmatpush1.bf16.msra.mxu0 %v257
        %271 = vmatprep.subr.bf16.mxu0 %v260
        %272 = vmatpush1.bf16.msra.mxu0 %v259
        %273 = vmatprep.subr.bf16.mxu0 0
        %274 = vmatpush1.bf16.msra.mxu0 0
        %275 = vmatprep.subr.bf16.mxu0 0
        %276 = vmatpush1.bf16.msra.mxu0 0
        %277 = vmatprep.subr.bf16.mxu0 0
        %278 = vmatpush1.bf16.msra.mxu0 0
        %279 = vmatprep.subr.bf16.mxu0 0
        %280 = vmatpush1.bf16.msra.mxu0 0
        %281 = vmatprep.subr.bf16.mxu0 0
        %282 = vmatpush1.bf16.msra.mxu0 0
        %283 = vmatprep.subr.bf16.mxu0 0
        %284 = vmatpush1.bf16.msra.mxu0 0
        %285 = vmatprep.subr.bf16.mxu0 0
        %286 = vmatpush1.bf16.msra.mxu0 0
        %287 = vmatprep.subr.bf16.mxu0 0
        %288 = vmatpush1.bf16.msra.mxu0 0
        %289 = vmatprep.subr.bf16.mxu0 0
        %290 = vmatpush1.bf16.msra.mxu0 0
        %291 = vmatprep.subr.bf16.mxu0 0
        %292 = vmatpush1.bf16.msra.mxu0 0
        %293 = vmatprep.subr.bf16.mxu0 0
        %294 = vmatpush1.bf16.msra.mxu0 0
        %295 = vmatprep.subr.bf16.mxu0 0
        %296 = vmatpush1.bf16.msra.mxu0 0
        %297 = vmatprep.subr.bf16.mxu0 0
        %298 = vmatpush1.bf16.msra.mxu0 0
        %299 = vmatprep.subr.bf16.mxu0 0
        %300 = vmatpush1.bf16.msra.mxu0 0
        %301 = vmatprep.mubr.bf16.mxu0 0
        %302 = vmatmul.mubr.bf16.gmra.mrb[0].mxu0 %v267
        %v303 = vpop.f32.mrb[0].mxu0
        %v304 = vadd.f32 0.0, %v303
        %v305 = vpop.f32.mrb[0].mxu0
        %v306 = vadd.f32 0.0, %v305
        %v307 = vpop.f32.mrb[0].mxu0
        %v308 = vpop.f32.mrb[0].mxu0
        %309 = vdwg.mxu0
        %v310 = vpack.c.bf16 %v304, %v304
        %v311 = vlaneseq
        %v312 = vshrl.u32 %v311, 7
        %v313 = vlaneseq
        %v314 = vand.u32 %v313, 127
        %vm315 = vcmp.eq.s32.totalorder %v312, %v314
        %v316 = vsel %vm315, 1, 0
        %v317 = vcvt.s32.f32 %v316
        %319 = vset.pattern.permute.xlu0 37
        %320 = vperm.xlu0 %319, %v304
        %v321 = vpop.permute.xlu0 %320
        %v323 = vmul.f32 %v317, %v321
        %v325 = vsel %vm265, %v310, 0
        %327 = vmatprep.subr.bf16.mxu0 0
        %328 = vmatpush1.bf16.xpose.msra.mxu0 %v267
        %329 = vmatprep.subr.bf16.mxu0 0
        %330 = vmatpush1.bf16.xpose.msra.mxu0 0
        %331 = vmatprep.subr.bf16.mxu0 0
        %332 = vmatpush1.bf16.xpose.msra.mxu0 0
        %333 = vmatprep.subr.bf16.mxu0 0
        %334 = vmatpush1.bf16.xpose.msra.mxu0 0
        %335 = vmatprep.subr.bf16.mxu0 0
        %336 = vmatpush1.bf16.xpose.msra.mxu0 0
        %337 = vmatprep.subr.bf16.mxu0 0
        %338 = vmatpush1.bf16.xpose.msra.mxu0 0
        %339 = vmatprep.subr.bf16.mxu0 0
        %340 = vmatpush1.bf16.xpose.msra.mxu0 0
        %341 = vmatprep.subr.bf16.mxu0 0
        %342 = vmatpush1.bf16.xpose.msra.mxu0 0
        %343 = vmatprep.subr.bf16.mxu0 0
        %344 = vmatpush1.bf16.xpose.msra.mxu0 0
        %345 = vmatprep.subr.bf16.mxu0 0
        %346 = vmatpush1.bf16.xpose.msra.mxu0 0
        %347 = vmatprep.subr.bf16.mxu0 0
        %348 = vmatpush1.bf16.xpose.msra.mxu0 0
        %349 = vmatprep.subr.bf16.mxu0 0
        %350 = vmatpush1.bf16.xpose.msra.mxu0 0
        %351 = vmatprep.subr.bf16.mxu0 0
        %352 = vmatpush1.bf16.xpose.msra.mxu0 0
        %353 = vmatprep.subr.bf16.mxu0 0
        %354 = vmatpush1.bf16.xpose.msra.mxu0 0
        %355 = vmatprep.subr.bf16.mxu0 0
        %356 = vmatpush1.bf16.xpose.msra.mxu0 0
        %357 = vmatprep.subr.bf16.mxu0 0
        %358 = vmatpush1.bf16.xpose.msra.mxu0 0
        %359 = vmatprep.mubr.bf16.mxu0 0
        %360 = vmatmul.mubr.bf16.gmra.mrb[0].mxu0 %v325
        %v361 = vpop.f32.mrb[0].mxu0
        %v362 = vadd.f32 %v323, %v361
        %v363 = vpop.f32.mrb[0].mxu0
        %v364 = vpop.f32.mrb[0].mxu0
        %v365 = vpop.f32.mrb[0].mxu0
        %366 = vdwg.mxu0
        %vm367 = vcmask 64512
        %368 = vst.msk [vmem:[%s231] sm:$0xff] %vm367, %v362
        %v369 = vld [vmem:[%s2] sm:$0x1]
        %v371 = vlaneseq
        %v372 = vshrl.u32 %v371, 7
        %v373 = vsub.s32 0, %v372
        %v374 = vrot.slane %v369, %v373
        %375 = vrot.lane.b32.xlu0 %v374, 32
        %v376 = vpop.permute.xlu0 %375
        %v378 = vadd.f32 %v304, %v376
        %v379 = vadd.f32 %v306, %v376
        %382 = vrot.lane.b32.xlu0 %v378, 96
        %v383 = vpop.permute.xlu0 %382
        %384 = vrot.lane.b32.xlu0 %v379, 96
        %v385 = vpop.permute.xlu0 %384
        %vm386 = vcmask 785408
        %v387 = vsel %vm386, %v383, %v385
        %389 = vst [vmem:[%s238] sm:$0xff] %v387
        %s390 = sand.u32 %s102, 1
        %s391 = scalar_lea.sflag [#allocation4], %s390
        %s392 = sand.u32 %s102, 1
        %s393 = smul.addr %s392, 8
        %s394 = scalar_lea.vmem [#allocation7], %s393
        %s395 = sand.u32 %s128, 1
        %s396 = scalar_lea.sflag [#allocation9], %s395
        %s397 = sand.u32 %s128, 1
        %s398 = smul.addr %s397, 8
        %s399 = scalar_lea.vmem [#allocation8], %s398
        // Predicated region
        $region41: #{tpu_custom_call.1} parent=31 // pred_check
          %p400 = pneg %p112
        $region42: #{tpu_custom_call.1} parent=31 // pred_check_branch
          %402 = sbr.rel (%p400) target = $region44
        $region43: #{tpu_custom_call.1} parent=31 // pred_region
          %s404 = ssub.s32 128, 128
          %405 = vsyncadd %s391, %s404
          %s406 = smul.addr %s26, 128
          %s407 = scalar_lea.hbm %s3, %s406
          %s409 = sshll.u32 %s394, 4
          %s410 = int_to_ptr.vmem [resolvable:$true] %s409
          %412 = dma.vmem_to_hbm [thread:$0]  %s410, 128, %s407, %s391
        $region44: #{tpu_custom_call.1} parent=31 // pred_fallthru
          _
        // Predicated region
        $region45: #{tpu_custom_call.1} parent=31 // pred_check
          %p413 = pneg %p138
        $region46: #{tpu_custom_call.1} parent=31 // pred_check_branch
          %415 = sbr.rel (%p413) target = $region48
        $region47: #{tpu_custom_call.1} parent=31 // pred_region
          %s417 = ssub.s32 128, 128
          %418 = vsyncadd %s396, %s417
          %s419 = smul.addr %s26, 128
          %s420 = scalar_lea.hbm %s4, %s419
          %s422 = sshll.u32 %s399, 4
          %s423 = int_to_ptr.vmem [resolvable:$true] %s422
          %425 = dma.vmem_to_hbm [thread:$0]  %s423, 128, %s420, %s396
        $region48: #{tpu_custom_call.1} parent=31 // pred_fallthru
          _
      $region32: #{tpu_custom_call.1} parent=5 // pred_fallthru
        _
      %p426 = scmp.le.s32.totalorder 2, %s21
      // Predicated region
      $region49: #{tpu_custom_call.1} parent=5 // pred_check
        %p427 = pneg %p426
      $region50: #{tpu_custom_call.1} parent=5 // pred_check_branch
        %429 = sbr.rel (%p427) target = $region52
      $region51: #{tpu_custom_call.1} parent=5 // pred_region
        %s430 = ssub.s32 %s21, 2
        // Predicated region
        $region53: #{tpu_custom_call.1} parent=51 // pred_check
          %p431 = pneg %p118
        $region54: #{tpu_custom_call.1} parent=51 // pred_check_branch
          %433 = sbr.rel (%p431) target = $region56
        $region55: #{tpu_custom_call.1} parent=51 // pred_region
          %s434 = sand.u32 %s103, 1
          %s435 = scalar_lea.sflag [#allocation4], %s434
          %s436 = sand.u32 %s103, 1
          %s437 = smul.addr %s436, 8
          %s438 = scalar_lea.vmem [#allocation7], %s437
          %439 = dma.done %s435, 128
        $region56: #{tpu_custom_call.1} parent=51 // pred_fallthru
          _
        // Predicated region
        $region57: #{tpu_custom_call.1} parent=51 // pred_check
          %p440 = pneg %p144
        $region58: #{tpu_custom_call.1} parent=51 // pred_check_branch
          %442 = sbr.rel (%p440) target = $region60
        $region59: #{tpu_custom_call.1} parent=51 // pred_region
          %s443 = sand.u32 %s129, 1
          %s444 = scalar_lea.sflag [#allocation9], %s443
          %s445 = sand.u32 %s129, 1
          %s446 = smul.addr %s445, 8
          %s447 = scalar_lea.vmem [#allocation8], %s446
          %448 = dma.done %s444, 128
        $region60: #{tpu_custom_call.1} parent=51 // pred_fallthru
          _
      $region52: #{tpu_custom_call.1} parent=5 // pred_fallthru
        _
    $region6: #{tpu_custom_call.1} parent=1 // loop_footer
      %s25 = sadd.s32 1, %s21
    $region7: #{tpu_custom_call.1} parent=1 // loop_footer_branch
      %20 = sbr.rel target = $region3
    $region8: #{tpu_custom_call.1} parent=1 // loop_exit
      _
    %449 = vsyncpa [#allocation3], 1
    %s450 = scalar_lea.sflag [#allocation3], 1
    %451 = vsyncpa %s450, 1
    %452 = vsyncpa [#allocation6], 1
    %453 = vsyncpa [#allocation4], 1
    %s454 = scalar_lea.sflag [#allocation4], 1
    %455 = vsyncpa %s454, 1
    %456 = vsyncpa [#allocation9], 1
    %s457 = scalar_lea.sflag [#allocation9], 1
    %458 = vsyncpa %s457, 1

</llo_original>
